<compile_context>
chip_gen: v5e
topology: v5e:2x2
jax: 0.10.0
libtpu: 0.0.40
codegen_flags: <defaults>
</compile_context>

<pallas_src>
import jax
import jax.numpy as jnp
import numpy as np
from jax.experimental import pallas as pl
from jax.experimental.pallas import tpu as pltpu


# ----------------------------------------------------------------------------
# Generation-aware scoped-VMEM limit: ~48 MiB on v7x (64 MiB physical),
# ~96 MiB on v5e/v6e (128 MiB physical).  Falls back to the conservative
# v7x-safe value if the hardware query is unavailable.
# ----------------------------------------------------------------------------
def _vmem_limit_bytes():
    phys = 64 << 20
    try:
        info_fn = getattr(pltpu, "get_tpu_info", None)
        if info_fn is not None:
            phys = int(getattr(info_fn(), "vmem_capacity_bytes", phys))
    except Exception:
        pass
    return int(min(96 << 20, max(32 << 20, (phys * 3) // 4)))


_VMEM_LIMIT = _vmem_limit_bytes()


# ----------------------------------------------------------------------------
# Kernel: one grid step == one block of Bt batch rows. Full hot path:
#   GRU cell (1 step, 1 layer) -> encoder attention -> context -> pointer
#   energies -> probs.  All lane-axis sizes are multiples of 128 (Hp).
# ----------------------------------------------------------------------------
def pointer_kernel(
    static_ref,      # (Bt, S, Hp)  static_hidden, seq-major per batch row
    dynamic_ref,     # (Bt, S, Hp)  dynamic_hidden, seq-major
    dec_ref,         # (Bt, Hp)     decoder_hidden (squeezed seq dim)
    h0_ref,          # (Bt, Hp)     previous GRU hidden state
    w_gru_ref,       # (2Hp, 3Hp)   [w_ih.T ; w_hh.T]  (gate order r|z|n)
    w_attn_ref,      # (3Hp, Hp)    [W_a_static.T ; W_a_dynamic.T ; W_a_rnn.T]
    w_ptr_ref,       # (2Hp, Hp)    [W_p_static.T ; W_p_context.T]
    vec_ref,         # (6, Hp)      rows: b_r, b_z, b_in, b_hn, v_a, v_p
    probs_ref,       # (Bt, S)  out, lane-dense
    hh_ref,          # (Bt, Hp) out, new hidden state
):
    f32 = jnp.float32
    Bt, S, Hp = static_ref.shape

    x = dec_ref[...]              # (Bt, Hp)
    h = h0_ref[...]               # (Bt, Hp)

    vecs = vec_ref[...]           # (6, Hp)
    b_r, b_z = vecs[0:1, :], vecs[1:2, :]
    b_in, b_hn = vecs[2:3, :], vecs[3:4, :]
    v_a, v_p = vecs[4:5, :], vecs[5:6, :]

    # ---- GRU cell (PyTorch gate order r, z, n), fused gate matmuls ----
    w_gru = w_gru_ref[...]                                        # (2Hp, 3Hp)
    gi = jnp.dot(x, w_gru[:Hp, :], preferred_element_type=f32)    # (Bt, 3Hp)
    gh = jnp.dot(h, w_gru[Hp:, :], preferred_element_type=f32)    # (Bt, 3Hp)

    i_r, i_z, i_n = gi[:, 0:Hp], gi[:, Hp:2 * Hp], gi[:, 2 * Hp:3 * Hp]
    h_r, h_z, h_n = gh[:, 0:Hp], gh[:, Hp:2 * Hp], gh[:, 2 * Hp:3 * Hp]

    r = jax.nn.sigmoid(i_r + h_r + b_r)
    z = jax.nn.sigmoid(i_z + h_z + b_z)
    n = jnp.tanh(i_n + b_in + r * (h_n + b_hn))
    h_new = (1.0 - z) * n + z * h                                 # (Bt, Hp)
    hh_ref[...] = h_new
    rnn_out = h_new        # TODO(synk): drop_rnn / drop_hh are identity (eval)

    st = static_ref[...]                                          # (Bt, S, Hp)
    dy = dynamic_ref[...]                                         # (Bt, S, Hp)
    st2 = st.reshape(Bt * S, Hp)
    dy2 = dy.reshape(Bt * S, Hp)

    # ---- encoder attention: softmax_s(v_a . tanh(W_a . [st; dy; rnn])) ----
    w_attn = w_attn_ref[...]                                      # (3Hp, Hp)
    hid_sd = (jnp.dot(st2, w_attn[0:Hp, :], preferred_element_type=f32)
              + jnp.dot(dy2, w_attn[Hp:2 * Hp, :], preferred_element_type=f32))
    # broadcast-commutation: project rnn_out once per batch row, bcast over S
    rnn_proj = jnp.dot(rnn_out, w_attn[2 * Hp:, :], preferred_element_type=f32)
    hid = hid_sd.reshape(Bt, S, Hp) + rnn_proj[:, None, :]        # (Bt, S, Hp)

    # v_a contraction on the VPU/XLU (lane reduce) instead of an N=1 matmul.
    # NOTE: the two tanh passes below are the likely binding (EUP) slot once
    # Bt is large; bf16 tanh on v6e/v7x is the next lever (tolerance change).
    logits = jnp.sum(jnp.tanh(hid) * v_a[None, :, :], axis=-1,
                     keepdims=True)                               # (Bt, S, 1)
    m = jnp.max(logits, axis=1, keepdims=True)                    # (Bt, 1, 1)
    ex = jnp.exp(logits - m)
    denom = jnp.sum(ex, axis=1, keepdims=True)                    # (Bt, 1, 1)
    # approx=True would push this to the EUP but loosens the 1e-5 check.
    attn = ex * pl.reciprocal(denom, approx=False)                # (Bt, S, 1)

    # ---- context = sum_s attn * static ----
    context = jnp.sum(attn * st, axis=1)                          # (Bt, Hp)

    # ---- pointer energies: v_p . tanh(W_p . [static; context]) ----
    w_ptr = w_ptr_ref[...]                                        # (2Hp, Hp)
    st_proj = jnp.dot(st2, w_ptr[0:Hp, :], preferred_element_type=f32)
    ctx_proj = jnp.dot(context, w_ptr[Hp:, :], preferred_element_type=f32)
    energy = st_proj.reshape(Bt, S, Hp) + ctx_proj[:, None, :]    # (Bt, S, Hp)

    # v_p contraction on the VPU/XLU; result written lane-dense as (Bt, S)
    probs_ref[...] = jnp.sum(jnp.tanh(energy) * v_p[None, :, :], axis=-1)


# ----------------------------------------------------------------------------
# Weight packing (rollout-invariant; hoist out of the decode loop at the
# call site).  Pads every H-sized axis / gate group to Hp = ceil(H/128)*128.
# ----------------------------------------------------------------------------
def pack_pointer_params(params):
    H = params["w_ih"].shape[1]
    Hp = -(-H // 128) * 128

    def pad_hh(x):   # (H, H) -> (Hp, Hp)
        return jnp.pad(x, ((0, Hp - H), (0, Hp - H)))

    def pad_h(x):    # (H,) -> (Hp,)
        return jnp.pad(x, ((0, Hp - H),))

    w_ih, w_hh = params["w_ih"], params["w_hh"]           # (3H, H)
    b_ih, b_hh = params["b_ih"], params["b_hh"]           # (3H,)

    wihT, whhT = w_ih.T, w_hh.T                           # (H, 3H), gates on cols
    w_gru = jnp.concatenate(
        [jnp.concatenate([pad_hh(wihT[:, g * H:(g + 1) * H]) for g in range(3)],
                         axis=1),
         jnp.concatenate([pad_hh(whhT[:, g * H:(g + 1) * H]) for g in range(3)],
                         axis=1)],
        axis=0)                                           # (2Hp, 3Hp)

    W_a = params["W_attn"][0]                             # (H, 3H)
    w_attn = jnp.concatenate(
        [pad_hh(W_a[:, 0:H].T), pad_hh(W_a[:, H:2 * H].T),
         pad_hh(W_a[:, 2 * H:3 * H].T)], axis=0)          # (3Hp, Hp)

    W_p = params["W"][0]                                  # (H, 2H)
    w_ptr = jnp.concatenate([pad_hh(W_p[:, 0:H].T), pad_hh(W_p[:, H:2 * H].T)],
                            axis=0)                       # (2Hp, Hp)

    vecs = jnp.stack(
        [pad_h(b_ih[0:H] + b_hh[0:H]),          # b_r
         pad_h(b_ih[H:2 * H] + b_hh[H:2 * H]),  # b_z
         pad_h(b_ih[2 * H:3 * H]),              # b_in
         pad_h(b_hh[2 * H:3 * H]),              # b_hn
         pad_h(params["v_attn"][0, 0]),         # v_a
         pad_h(params["v"][0, 0])], axis=0)     # v_p       -> (6, Hp)

    return w_gru, w_attn, w_ptr, vecs


# ----------------------------------------------------------------------------
# Wrapper (layout prep, batch blocking, pallas_call)
# ----------------------------------------------------------------------------
@jax.jit
def pointer_forward(params, static_hidden, dynamic_hidden, decoder_hidden, last_hh):
    B, H, S = static_hidden.shape
    Hp = -(-H // 128) * 128

    # Rollout-invariant work (hoist to call site in a real decode loop):
    w_gru, w_attn, w_ptr, vecs = pack_pointer_params(params)
    static_t = jnp.transpose(static_hidden, (0, 2, 1))    # (B, S, H)

    dynamic_t = jnp.transpose(dynamic_hidden, (0, 2, 1))  # (B, S, H)
    dec = decoder_hidden[:, :, 0]                         # (B, H)
    h0 = last_hh[0]                                       # (B, H)

    # ---- pad hidden axis to Hp (zero pad is semantics-preserving) ----
    if Hp != H:
        ph = Hp - H
        static_t = jnp.pad(static_t, ((0, 0), (0, 0), (0, ph)))
        dynamic_t = jnp.pad(dynamic_t, ((0, 0), (0, 0), (0, ph)))
        dec = jnp.pad(dec, ((0, 0), (0, ph)))
        h0 = jnp.pad(h0, ((0, 0), (0, ph)))

    # ---- batch block from a VMEM budget (2 inputs x 2 buffers + ~4 temps) ----
    row_bytes = (2 * 2 + 4) * S * Hp * 4
    budget = max(8 * row_bytes, _VMEM_LIMIT - (8 << 20))
    Bt = int(min(256, max(8, budget // row_bytes)))
    Bt = max(8, (Bt // 8) * 8)
    if B > Bt:
        Bp = -(-B // Bt) * Bt
    elif B >= 16 and (B // 2) % 8 == 0:
        Bt, Bp = B // 2, B        # grid >= 2: both v7x TensorCores get work
    else:
        Bt, Bp = B, B

    if Bp != B:
        pb = Bp - B
        static_t = jnp.pad(static_t, ((0, pb), (0, 0), (0, 0)))
        dynamic_t = jnp.pad(dynamic_t, ((0, pb), (0, 0), (0, 0)))
        dec = jnp.pad(dec, ((0, pb), (0, 0)))
        h0 = jnp.pad(h0, ((0, pb), (0, 0)))

    def const2d(shape):
        return pl.BlockSpec(shape, lambda b: (0, 0))

    in_specs = [
        pl.BlockSpec((Bt, S, Hp), lambda b: (b, 0, 0)),   # static_t
        pl.BlockSpec((Bt, S, Hp), lambda b: (b, 0, 0)),   # dynamic_t
        pl.BlockSpec((Bt, Hp), lambda b: (b, 0)),         # dec
        pl.BlockSpec((Bt, Hp), lambda b: (b, 0)),         # h0
        const2d((2 * Hp, 3 * Hp)),                        # w_gru
        const2d((3 * Hp, Hp)),                            # w_attn
        const2d((2 * Hp, Hp)),                            # w_ptr
        const2d((6, Hp)),                                 # biases + v_a + v_p
    ]
    out_specs = [
        pl.BlockSpec((Bt, S), lambda b: (b, 0)),          # probs (lane-dense)
        pl.BlockSpec((Bt, Hp), lambda b: (b, 0)),         # new hidden state
    ]
    out_shape = [
        jax.ShapeDtypeStruct((Bp, S), jnp.float32),
        jax.ShapeDtypeStruct((Bp, Hp), jnp.float32),
    ]

    probs_p, hh_p = pl.pallas_call(
        pointer_kernel,
        grid=(Bp // Bt,),
        in_specs=in_specs,
        out_specs=out_specs,
        out_shape=out_shape,
        compiler_params=pltpu.CompilerParams(
            dimension_semantics=("parallel",),
            vmem_limit_bytes=_VMEM_LIMIT),
    )(static_t, dynamic_t, dec, h0, w_gru, w_attn, w_ptr, vecs)

    probs = probs_p[:B]                       # (B, S)
    last_hh_new = hh_p[:B, :H][None]          # (1, B, H)
    return probs, last_hh_new


# ----------------------------------------------------------------------------
# Pure-JAX reference (direct transcription of the PyTorch forward, eval mode)
# ----------------------------------------------------------------------------
def pointer_reference(params, static_hidden, dynamic_hidden, decoder_hidden, last_hh):
    B, H, S = static_hidden.shape
    x = jnp.transpose(decoder_hidden, (0, 2, 1))[:, 0, :]   # (B, H)
    h = last_hh[0]                                           # (B, H)
    gi = x @ params["w_ih"].T + params["b_ih"]
    gh = h @ params["w_hh"].T + params["b_hh"]
    i_r, i_z, i_n = jnp.split(gi, 3, axis=1)
    h_r, h_z, h_n = jnp.split(gh, 3, axis=1)
    r = jax.nn.sigmoid(i_r + h_r)
    z = jax.nn.sigmoid(i_z + h_z)
    n = jnp.tanh(i_n + r * h_n)
    h_new = (1.0 - z) * n + z * h                            # rnn_out (dropout = id)

    hidden = jnp.concatenate(
        [static_hidden, dynamic_hidden,
         jnp.broadcast_to(h_new[:, :, None], (B, H, S))], axis=1)        # (B, 3H, S)
    attns = jax.nn.softmax(
        params["v_attn"] @ jnp.tanh(params["W_attn"] @ hidden), axis=2)  # (B, 1, S)
    context = attns @ jnp.transpose(static_hidden, (0, 2, 1))            # (B, 1, H)
    context = jnp.broadcast_to(jnp.transpose(context, (0, 2, 1)), (B, H, S))
    energy = jnp.concatenate([static_hidden, context], axis=1)           # (B, 2H, S)
    probs = (params["v"] @ jnp.tanh(params["W"] @ energy))[:, 0, :]      # (B, S)
    return probs, h_new[None]


# ----------------------------------------------------------------------------
# Deterministic parameter init (shapes from Pointer.__init__ / nn.GRU /
# Attention). The torch code zero-inits v and W; we use small random values so
# the kernel test is non-trivial.
# ----------------------------------------------------------------------------
def init_params(key, H):
    keys = jax.random.split(key, 8)
    scale = 1.0 / float(np.sqrt(H))

    def u(k, shape):
        return jax.random.uniform(k, shape, jnp.float32, -scale, scale)

    return {
        "w_ih": u(keys[0], (3 * H, H)),       # GRU weight_ih_l0
        "w_hh": u(keys[1], (3 * H, H)),       # GRU weight_hh_l0
        "b_ih": u(keys[2], (3 * H,)),
        "b_hh": u(keys[3], (3 * H,)),
        "v": u(keys[4], (1, 1, H)),           # Pointer.v
        "W": u(keys[5], (1, H, 2 * H)),       # Pointer.W
        "v_attn": u(keys[6], (1, 1, H)),      # Attention.v
        "W_attn": u(keys[7], (1, H, 3 * H)),  # Attention.W
    }


def _run_case(params, key, B, H, S):
    k1, k2, k3, k4 = jax.random.split(key, 4)
    static_hidden = jax.random.normal(k1, (B, H, S), jnp.float32)
    dynamic_hidden = jax.random.normal(k2, (B, H, S), jnp.float32)
    decoder_hidden = jax.random.normal(k3, (B, H, 1), jnp.float32)
    last_hh = jax.random.normal(k4, (1, B, H), jnp.float32)

    probs, new_hh = pointer_forward(params, static_hidden, dynamic_hidden,
                                    decoder_hidden, last_hh)
    jax.block_until_ready((probs, new_hh))

    ref_probs, ref_hh = pointer_reference(params, static_hidden, dynamic_hidden,
                                          decoder_hidden, last_hh)
    np.testing.assert_allclose(np.asarray(probs), np.asarray(ref_probs),
                               rtol=1e-5, atol=1e-5)
    np.testing.assert_allclose(np.asarray(new_hh), np.asarray(ref_hh),
                               rtol=1e-5, atol=1e-5)
    assert probs.shape == (B, S) and new_hh.shape == (1, B, H)


if __name__ == "__main__":
    H, S = 32, 8
    key = jax.random.PRNGKey(0)
    kp, kc1, kc2 = jax.random.split(key, 3)
    params = init_params(kp, H)

    _run_case(params, kc1, B=2, H=H, S=S)    # small batch, single block
    _run_case(params, kc2, B=16, H=H, S=S)   # grid=2 path (2-block batch split)
    print("KERNEL_OK")
</pallas_src>

<mosaic_0001>
module attributes {stable_mosaic.version = 11 : i64} {
  func.func @pointer_kernel(%arg0: i32, %arg1: memref<2x8x128xf32, #tpu.memory_space<vmem>>, %arg2: memref<2x8x128xf32, #tpu.memory_space<vmem>>, %arg3: memref<2x128xf32, #tpu.memory_space<vmem>>, %arg4: memref<2x128xf32, #tpu.memory_space<vmem>>, %arg5: memref<256x384xf32, #tpu.memory_space<vmem>>, %arg6: memref<384x128xf32, #tpu.memory_space<vmem>>, %arg7: memref<256x128xf32, #tpu.memory_space<vmem>>, %arg8: memref<6x128xf32, #tpu.memory_space<vmem>>, %arg9: memref<2x8xf32, #tpu.memory_space<vmem>>, %arg10: memref<2x128xf32, #tpu.memory_space<vmem>>) attributes {dimension_semantics = [#tpu.dimension_semantics<parallel>], iteration_bounds = array<i64: 1>, scalar_prefetch = 0 : i64, scratch_operands = 0 : i64, tpu.core_type = #tpu.core_type<tc>, window_params = [{transform_indices = @transform_0, window_bounds = array<i64: 2, 8, 128>}, {transform_indices = @transform_1, window_bounds = array<i64: 2, 8, 128>}, {transform_indices = @transform_2, window_bounds = array<i64: 2, 128>}, {transform_indices = @transform_3, window_bounds = array<i64: 2, 128>}, {pipeline_mode = #tpu.pipeline_mode<synchronous>, transform_indices = @transform_4, window_bounds = array<i64: 256, 384>}, {pipeline_mode = #tpu.pipeline_mode<synchronous>, transform_indices = @transform_5, window_bounds = array<i64: 384, 128>}, {pipeline_mode = #tpu.pipeline_mode<synchronous>, transform_indices = @transform_6, window_bounds = array<i64: 256, 128>}, {pipeline_mode = #tpu.pipeline_mode<synchronous>, transform_indices = @transform_7, window_bounds = array<i64: 6, 128>}, {transform_indices = @transform_8, window_bounds = array<i64: 2, 8>}, {transform_indices = @transform_9, window_bounds = array<i64: 2, 128>}]} {
    %c0 = arith.constant 0 : index
    %c0_0 = arith.constant 0 : index
    %0 = vector.load %arg3[%c0, %c0_0] : memref<2x128xf32, #tpu.memory_space<vmem>>, vector<2x128xf32>
    %c0_1 = arith.constant 0 : index
    %c0_2 = arith.constant 0 : index
    %1 = vector.load %arg4[%c0_1, %c0_2] : memref<2x128xf32, #tpu.memory_space<vmem>>, vector<2x128xf32>
    %c0_3 = arith.constant 0 : index
    %c0_4 = arith.constant 0 : index
    %2 = vector.load %arg8[%c0_3, %c0_4] : memref<6x128xf32, #tpu.memory_space<vmem>>, vector<6x128xf32>
    %3 = vector.extract_strided_slice %2 {offsets = [0, 0], sizes = [1, 128], strides = [1, 1]} : vector<6x128xf32> to vector<1x128xf32>
    %4 = vector.extract_strided_slice %2 {offsets = [1, 0], sizes = [1, 128], strides = [1, 1]} : vector<6x128xf32> to vector<1x128xf32>
    %5 = vector.extract_strided_slice %2 {offsets = [2, 0], sizes = [1, 128], strides = [1, 1]} : vector<6x128xf32> to vector<1x128xf32>
    %6 = vector.extract_strided_slice %2 {offsets = [3, 0], sizes = [1, 128], strides = [1, 1]} : vector<6x128xf32> to vector<1x128xf32>
    %7 = vector.extract_strided_slice %2 {offsets = [4, 0], sizes = [1, 128], strides = [1, 1]} : vector<6x128xf32> to vector<1x128xf32>
    %8 = vector.extract_strided_slice %2 {offsets = [5, 0], sizes = [1, 128], strides = [1, 1]} : vector<6x128xf32> to vector<1x128xf32>
    %c0_5 = arith.constant 0 : index
    %c0_6 = arith.constant 0 : index
    %9 = vector.load %arg5[%c0_5, %c0_6] : memref<256x384xf32, #tpu.memory_space<vmem>>, vector<256x384xf32>
    %10 = vector.extract_strided_slice %9 {offsets = [0, 0], sizes = [128, 384], strides = [1, 1]} : vector<256x384xf32> to vector<128x384xf32>
    %cst = arith.constant dense<0.000000e+00> : vector<2x384xf32>
    %11 = tpu.matmul %0, %10, %cst {dimension_numbers = #tpu.dot_dimension_numbers<[1], [0], [0], [1], [0, 0, 1, 1], [], []>} : vector<2x128xf32>, vector<128x384xf32>, vector<2x384xf32> -> vector<2x384xf32>
    %12 = vector.extract_strided_slice %9 {offsets = [128, 0], sizes = [128, 384], strides = [1, 1]} : vector<256x384xf32> to vector<128x384xf32>
    %cst_7 = arith.constant dense<0.000000e+00> : vector<2x384xf32>
    %13 = tpu.matmul %1, %12, %cst_7 {dimension_numbers = #tpu.dot_dimension_numbers<[1], [0], [0], [1], [0, 0, 1, 1], [], []>} : vector<2x128xf32>, vector<128x384xf32>, vector<2x384xf32> -> vector<2x384xf32>
    %14 = vector.extract_strided_slice %11 {offsets = [0, 0], sizes = [2, 128], strides = [1, 1]} : vector<2x384xf32> to vector<2x128xf32>
    %15 = vector.extract_strided_slice %11 {offsets = [0, 128], sizes = [2, 128], strides = [1, 1]} : vector<2x384xf32> to vector<2x128xf32>
    %16 = vector.extract_strided_slice %11 {offsets = [0, 256], sizes = [2, 128], strides = [1, 1]} : vector<2x384xf32> to vector<2x128xf32>
    %17 = vector.extract_strided_slice %13 {offsets = [0, 0], sizes = [2, 128], strides = [1, 1]} : vector<2x384xf32> to vector<2x128xf32>
    %18 = vector.extract_strided_slice %13 {offsets = [0, 128], sizes = [2, 128], strides = [1, 1]} : vector<2x384xf32> to vector<2x128xf32>
    %19 = vector.extract_strided_slice %13 {offsets = [0, 256], sizes = [2, 128], strides = [1, 1]} : vector<2x384xf32> to vector<2x128xf32>
    %20 = arith.addf %14, %17 : vector<2x128xf32>
    %21 = vector.broadcast %3 : vector<1x128xf32> to vector<2x128xf32>
    %22 = arith.addf %20, %21 : vector<2x128xf32>
    %23 = arith.negf %22 : vector<2x128xf32>
    %24 = math.exp %23 : vector<2x128xf32>
    %cst_8 = arith.constant 1.000000e+00 : f32
    %25 = vector.broadcast %cst_8 : f32 to vector<2x128xf32>
    %26 = arith.addf %25, %24 : vector<2x128xf32>
    %27 = arith.divf %25, %26 : vector<2x128xf32>
    %28 = arith.addf %15, %18 : vector<2x128xf32>
    %29 = vector.broadcast %4 : vector<1x128xf32> to vector<2x128xf32>
    %30 = arith.addf %28, %29 : vector<2x128xf32>
    %31 = arith.negf %30 : vector<2x128xf32>
    %32 = math.exp %31 : vector<2x128xf32>
    %cst_9 = arith.constant 1.000000e+00 : f32
    %33 = vector.broadcast %cst_9 : f32 to vector<2x128xf32>
    %34 = arith.addf %33, %32 : vector<2x128xf32>
    %35 = arith.divf %33, %34 : vector<2x128xf32>
    %36 = vector.broadcast %5 : vector<1x128xf32> to vector<2x128xf32>
    %37 = arith.addf %16, %36 : vector<2x128xf32>
    %38 = vector.broadcast %6 : vector<1x128xf32> to vector<2x128xf32>
    %39 = arith.addf %19, %38 : vector<2x128xf32>
    %40 = arith.mulf %27, %39 : vector<2x128xf32>
    %41 = arith.addf %37, %40 : vector<2x128xf32>
    %42 = math.tanh %41 : vector<2x128xf32>
    %cst_10 = arith.constant 1.000000e+00 : f32
    %43 = vector.broadcast %cst_10 : f32 to vector<2x128xf32>
    %44 = arith.subf %43, %35 : vector<2x128xf32>
    %45 = arith.mulf %44, %42 : vector<2x128xf32>
    %46 = arith.mulf %35, %1 : vector<2x128xf32>
    %47 = arith.addf %45, %46 : vector<2x128xf32>
    %c0_11 = arith.constant 0 : index
    %c0_12 = arith.constant 0 : index
    %48 = vector.load %arg10[%c0_11, %c0_12] : memref<2x128xf32, #tpu.memory_space<vmem>>, vector<2x128xf32>
    tpu.vector_store %arg10[%c0_11, %c0_12], %47 {strides = array<i32>} : memref<2x128xf32, #tpu.memory_space<vmem>>, vector<2x128xf32>,
    %c0_13 = arith.constant 0 : index
    %c0_14 = arith.constant 0 : index
    %c0_15 = arith.constant 0 : index
    %49 = vector.load %arg1[%c0_13, %c0_14, %c0_15] : memref<2x8x128xf32, #tpu.memory_space<vmem>>, vector<2x8x128xf32>
    %c0_16 = arith.constant 0 : index
    %c0_17 = arith.constant 0 : index
    %c0_18 = arith.constant 0 : index
    %50 = vector.load %arg2[%c0_16, %c0_17, %c0_18] : memref<2x8x128xf32, #tpu.memory_space<vmem>>, vector<2x8x128xf32>
    %51 = vector.shape_cast %49 : vector<2x8x128xf32> to vector<16x128xf32>
    %52 = vector.shape_cast %50 : vector<2x8x128xf32> to vector<16x128xf32>
    %c0_19 = arith.constant 0 : index
    %c0_20 = arith.constant 0 : index
    %53 = vector.load %arg6[%c0_19, %c0_20] : memref<384x128xf32, #tpu.memory_space<vmem>>, vector<384x128xf32>
    %54 = vector.extract_strided_slice %53 {offsets = [0, 0], sizes = [128, 128], strides = [1, 1]} : vector<384x128xf32> to vector<128x128xf32>
    %cst_21 = arith.constant dense<0.000000e+00> : vector<16x128xf32>
    %55 = tpu.matmul %51, %54, %cst_21 {dimension_numbers = #tpu.dot_dimension_numbers<[1], [0], [0], [1], [0, 0, 1, 1], [], []>} : vector<16x128xf32>, vector<128x128xf32>, vector<16x128xf32> -> vector<16x128xf32>
    %56 = vector.extract_strided_slice %53 {offsets = [128, 0], sizes = [128, 128], strides = [1, 1]} : vector<384x128xf32> to vector<128x128xf32>
    %cst_22 = arith.constant dense<0.000000e+00> : vector<16x128xf32>
    %57 = tpu.matmul %52, %56, %cst_22 {dimension_numbers = #tpu.dot_dimension_numbers<[1], [0], [0], [1], [0, 0, 1, 1], [], []>} : vector<16x128xf32>, vector<128x128xf32>, vector<16x128xf32> -> vector<16x128xf32>
    %58 = arith.addf %55, %57 : vector<16x128xf32>
    %59 = vector.extract_strided_slice %53 {offsets = [256, 0], sizes = [128, 128], strides = [1, 1]} : vector<384x128xf32> to vector<128x128xf32>
    %cst_23 = arith.constant dense<0.000000e+00> : vector<2x128xf32>
    %60 = tpu.matmul %47, %59, %cst_23 {dimension_numbers = #tpu.dot_dimension_numbers<[1], [0], [0], [1], [0, 0, 1, 1], [], []>} : vector<2x128xf32>, vector<128x128xf32>, vector<2x128xf32> -> vector<2x128xf32>
    %61 = vector.shape_cast %58 : vector<16x128xf32> to vector<2x8x128xf32>
    %62 = vector.shape_cast %60 : vector<2x128xf32> to vector<2x1x128xf32>
    %63 = vector.broadcast %62 : vector<2x1x128xf32> to vector<2x8x128xf32>
    %64 = arith.addf %61, %63 : vector<2x8x128xf32>
    %65 = math.tanh %64 : vector<2x8x128xf32>
    %66 = vector.shape_cast %7 : vector<1x128xf32> to vector<1x1x128xf32>
    %67 = vector.broadcast %66 : vector<1x1x128xf32> to vector<2x8x128xf32>
    %68 = arith.mulf %65, %67 : vector<2x8x128xf32>
    %cst_24 = arith.constant dense<0.000000e+00> : vector<2x8xf32>
    %69 = vector.multi_reduction <add>, %68, %cst_24 [2] : vector<2x8x128xf32> to vector<2x8xf32>
    %70 = vector.shape_cast %69 : vector<2x8xf32> to vector<2x8x1xf32>
    %cst_25 = arith.constant dense<0xFF800000> : vector<2x1xf32>
    %71 = vector.multi_reduction <maximumf>, %70, %cst_25 [1] : vector<2x8x1xf32> to vector<2x1xf32>
    %72 = vector.shape_cast %71 : vector<2x1xf32> to vector<2x1x1xf32>
    %73 = vector.broadcast %72 : vector<2x1x1xf32> to vector<2x8x1xf32>
    %74 = arith.subf %70, %73 : vector<2x8x1xf32>
    %75 = math.exp %74 : vector<2x8x1xf32>
    %cst_26 = arith.constant dense<0.000000e+00> : vector<2x1xf32>
    %76 = vector.multi_reduction <add>, %75, %cst_26 [1] : vector<2x8x1xf32> to vector<2x1xf32>
    %77 = vector.shape_cast %76 : vector<2x1xf32> to vector<2x1x1xf32>
    %78 = tpu.reciprocal %77 : vector<2x1x1xf32> -> vector<2x1x1xf32>
    %79 = vector.broadcast %78 : vector<2x1x1xf32> to vector<2x8x1xf32>
    %80 = arith.mulf %75, %79 : vector<2x8x1xf32>
    %81 = vector.broadcast %80 : vector<2x8x1xf32> to vector<2x8x128xf32>
    %82 = arith.mulf %81, %49 : vector<2x8x128xf32>
    %cst_27 = arith.constant dense<0.000000e+00> : vector<2x128xf32>
    %83 = vector.multi_reduction <add>, %82, %cst_27 [1] : vector<2x8x128xf32> to vector<2x128xf32>
    %c0_28 = arith.constant 0 : index
    %c0_29 = arith.constant 0 : index
    %84 = vector.load %arg7[%c0_28, %c0_29] : memref<256x128xf32, #tpu.memory_space<vmem>>, vector<256x128xf32>
    %85 = vector.extract_strided_slice %84 {offsets = [0, 0], sizes = [128, 128], strides = [1, 1]} : vector<256x128xf32> to vector<128x128xf32>
    %cst_30 = arith.constant dense<0.000000e+00> : vector<16x128xf32>
    %86 = tpu.matmul %51, %85, %cst_30 {dimension_numbers = #tpu.dot_dimension_numbers<[1], [0], [0], [1], [0, 0, 1, 1], [], []>} : vector<16x128xf32>, vector<128x128xf32>, vector<16x128xf32> -> vector<16x128xf32>
    %87 = vector.extract_strided_slice %84 {offsets = [128, 0], sizes = [128, 128], strides = [1, 1]} : vector<256x128xf32> to vector<128x128xf32>
    %cst_31 = arith.constant dense<0.000000e+00> : vector<2x128xf32>
    %88 = tpu.matmul %83, %87, %cst_31 {dimension_numbers = #tpu.dot_dimension_numbers<[1], [0], [0], [1], [0, 0, 1, 1], [], []>} : vector<2x128xf32>, vector<128x128xf32>, vector<2x128xf32> -> vector<2x128xf32>
    %89 = vector.shape_cast %86 : vector<16x128xf32> to vector<2x8x128xf32>
    %90 = vector.shape_cast %88 : vector<2x128xf32> to vector<2x1x128xf32>
    %91 = vector.broadcast %90 : vector<2x1x128xf32> to vector<2x8x128xf32>
    %92 = arith.addf %89, %91 : vector<2x8x128xf32>
    %93 = math.tanh %92 : vector<2x8x128xf32>
    %94 = vector.shape_cast %8 : vector<1x128xf32> to vector<1x1x128xf32>
    %95 = vector.broadcast %94 : vector<1x1x128xf32> to vector<2x8x128xf32>
    %96 = arith.mulf %93, %95 : vector<2x8x128xf32>
    %cst_32 = arith.constant dense<0.000000e+00> : vector<2x8xf32>
    %97 = vector.multi_reduction <add>, %96, %cst_32 [2] : vector<2x8x128xf32> to vector<2x8xf32>
    %c0_33 = arith.constant 0 : index
    %c0_34 = arith.constant 0 : index
    %98 = vector.load %arg9[%c0_33, %c0_34] : memref<2x8xf32, #tpu.memory_space<vmem>>, vector<2x8xf32>
    tpu.vector_store %arg9[%c0_33, %c0_34], %97 {strides = array<i32>} : memref<2x8xf32, #tpu.memory_space<vmem>>, vector<2x8xf32>,
    return
  }
  func.func @transform_0(%arg0: i32) -> (i32, i32, i32) {
    %c0_i32 = arith.constant 0 : i32
    %c0_i32_0 = arith.constant 0 : i32
    %c0_i32_1 = arith.constant 0 : i32
    return %arg0, %c0_i32, %c0_i32_0 : i32, i32, i32
  }
  func.func @transform_1(%arg0: i32) -> (i32, i32, i32) {
    %c0_i32 = arith.constant 0 : i32
    %c0_i32_0 = arith.constant 0 : i32
    %c0_i32_1 = arith.constant 0 : i32
    return %arg0, %c0_i32, %c0_i32_0 : i32, i32, i32
  }
  func.func @transform_2(%arg0: i32) -> (i32, i32) {
    %c0_i32 = arith.constant 0 : i32
    %c0_i32_0 = arith.constant 0 : i32
    return %arg0, %c0_i32 : i32, i32
  }
  func.func @transform_3(%arg0: i32) -> (i32, i32) {
    %c0_i32 = arith.constant 0 : i32
    %c0_i32_0 = arith.constant 0 : i32
    return %arg0, %c0_i32 : i32, i32
  }
  func.func @transform_4(%arg0: i32) -> (i32, i32) {
    %c0_i32 = arith.constant 0 : i32
    %c0_i32_0 = arith.constant 0 : i32
    %c0_i32_1 = arith.constant 0 : i32
    return %c0_i32, %c0_i32_0 : i32, i32
  }
  func.func @transform_5(%arg0: i32) -> (i32, i32) {
    %c0_i32 = arith.constant 0 : i32
    %c0_i32_0 = arith.constant 0 : i32
    %c0_i32_1 = arith.constant 0 : i32
    return %c0_i32, %c0_i32_0 : i32, i32
  }
  func.func @transform_6(%arg0: i32) -> (i32, i32) {
    %c0_i32 = arith.constant 0 : i32
    %c0_i32_0 = arith.constant 0 : i32
    %c0_i32_1 = arith.constant 0 : i32
    return %c0_i32, %c0_i32_0 : i32, i32
  }
  func.func @transform_7(%arg0: i32) -> (i32, i32) {
    %c0_i32 = arith.constant 0 : i32
    %c0_i32_0 = arith.constant 0 : i32
    %c0_i32_1 = arith.constant 0 : i32
    return %c0_i32, %c0_i32_0 : i32, i32
  }
  func.func @transform_8(%arg0: i32) -> (i32, i32) {
    %c0_i32 = arith.constant 0 : i32
    %c0_i32_0 = arith.constant 0 : i32
    return %arg0, %c0_i32 : i32, i32
  }
  func.func @transform_9(%arg0: i32) -> (i32, i32) {
    %c0_i32 = arith.constant 0 : i32
    %c0_i32_0 = arith.constant 0 : i32
    return %arg0, %c0_i32 : i32, i32
  }
}

</mosaic_0001>

<llo_original>
// kernel: pointer_forward.1
$region0: #{pointer_forward.1}
  #allocation0 [shape = 'u32[]', space=smem, size = 0x4, offset = 0x4, fixed_abs, tag = 'smem constant byte address 0x4 - core index']
  #allocation1 [shape = 'u32[72,128]{1,0:T(1,128)}', space=vmem, size = 0x9000, scoped, tag = 'internal scratch']
  %s0 = inlined_call_operand.vmem [shape: f32[2,8,128], index: 0, kind: input, shape index: {}]
  %s1 = inlined_call_operand.vmem [shape: f32[2,8,128], index: 1, kind: input, shape index: {}]
  %s2 = inlined_call_operand.vmem [shape: f32[2,128], index: 2, kind: input, shape index: {}]
  %s3 = inlined_call_operand.vmem [shape: f32[2,128], index: 3, kind: input, shape index: {}]
  %s4 = inlined_call_operand.vmem [shape: f32[256,384], index: 4, kind: input, shape index: {}]
  %s5 = inlined_call_operand.vmem [shape: f32[384,128], index: 5, kind: input, shape index: {}]
  %s6 = inlined_call_operand.vmem [shape: f32[256,128], index: 6, kind: input, shape index: {}]
  %s7 = inlined_call_operand.vmem [shape: f32[6,128], index: 7, kind: input, shape index: {}]
  %s8 = inlined_call_operand.hbm [shape: f32[2,8], index: 8, kind: output, shape index: {0}]
  %s9 = inlined_call_operand.vmem [shape: f32[2,128], index: 9, kind: output, shape index: {1}]
  %10 = xla_tuple %s8, %s9
  %s11 = sld [smem:[#allocation0]]
  $region50: #{pointer_forward.1} parent=0
    _
  %s13 = ssub.s32 1, %s11
  %s14 = scalar_select 0, %s13, %s11
  $region1: #{pointer_forward.1} parent=0
    #allocation2 [shape = 'u8[1024]{0}', space=vmem, size = 0x400, scoped, tag = 'output window, operand 0, single buffered']
    #allocation3 [shape = 's32[1]{0}', space=sflag, size = 0x4, scoped, tag = 'scoped memory for pointer_forward.1']
    %15 = vsyncpa [#allocation3], 0
    // Predicated region
    $region2: #{pointer_forward.1} parent=1 // pred_check
      _
    $region3: #{pointer_forward.1} parent=1 // pred_check_branch
      %17 = sbr.rel (0) target = $region5
    $region4: #{pointer_forward.1} parent=1 // pred_region
      _
    $region5: #{pointer_forward.1} parent=1 // pred_fallthru
      _
    // Predicated region
    $region6: #{pointer_forward.1} parent=1 // pred_check
      _
    $region7: #{pointer_forward.1} parent=1 // pred_check_branch
      %19 = sbr.rel (0) target = $region9
    $region8: #{pointer_forward.1} parent=1 // pred_region
      _
    $region9: #{pointer_forward.1} parent=1 // pred_fallthru
      _
    // Predicated region
    $region10: #{pointer_forward.1} parent=1 // pred_check
      _
    $region11: #{pointer_forward.1} parent=1 // pred_check_branch
      %21 = sbr.rel (0) target = $region13
    $region12: #{pointer_forward.1} parent=1 // pred_region
      _
    $region13: #{pointer_forward.1} parent=1 // pred_fallthru
      _
    // Predicated region
    $region14: #{pointer_forward.1} parent=1 // pred_check
      _
    $region15: #{pointer_forward.1} parent=1 // pred_check_branch
      %23 = sbr.rel (0) target = $region17
    $region16: #{pointer_forward.1} parent=1 // pred_region
      _
    $region17: #{pointer_forward.1} parent=1 // pred_fallthru
      _
    // Predicated region
    $region18: #{pointer_forward.1} parent=1 // pred_check
      _
    $region19: #{pointer_forward.1} parent=1 // pred_check_branch
      %25 = sbr.rel (0) target = $region21
    $region20: #{pointer_forward.1} parent=1 // pred_region
      _
    $region21: #{pointer_forward.1} parent=1 // pred_fallthru
      _
    // Predicated region
    $region22: #{pointer_forward.1} parent=1 // pred_check
      _
    $region23: #{pointer_forward.1} parent=1 // pred_check_branch
      %27 = sbr.rel (0) target = $region25
    $region24: #{pointer_forward.1} parent=1 // pred_region
      _
    $region25: #{pointer_forward.1} parent=1 // pred_fallthru
      _
    // Predicated region
    $region26: #{pointer_forward.1} parent=1 // pred_check
      _
    $region27: #{pointer_forward.1} parent=1 // pred_check_branch
      %29 = sbr.rel (0) target = $region29
    $region28: #{pointer_forward.1} parent=1 // pred_region
      _
    $region29: #{pointer_forward.1} parent=1 // pred_fallthru
      _
    // Predicated region
    $region30: #{pointer_forward.1} parent=1 // pred_check
      _
    $region31: #{pointer_forward.1} parent=1 // pred_check_branch
      %31 = sbr.rel (0) target = $region33
    $region32: #{pointer_forward.1} parent=1 // pred_region
      _
    $region33: #{pointer_forward.1} parent=1 // pred_fallthru
      _
    %v32 = vld [vmem:[%s2] sm:$0x3]
    %v33 = vld [vmem:[%s3] sm:$0x3]
    %v34 = vld [vmem:[%s7] sm:$0x3f]
    %v35 = vld [vmem:[%s4] sm:$0xff]
    %v36 = vld [vmem:[%s4 + $0x8] sm:$0xff]
    %v37 = vld [vmem:[%s4 + $0x10] sm:$0xff]
    %v38 = vld [vmem:[%s4 + $0x18] sm:$0xff]
    %v39 = vld [vmem:[%s4 + $0x20] sm:$0xff]
    %v40 = vld [vmem:[%s4 + $0x28] sm:$0xff]
    %v41 = vld [vmem:[%s4 + $0x30] sm:$0xff]
    %v42 = vld [vmem:[%s4 + $0x38] sm:$0xff]
    %v43 = vld [vmem:[%s4 + $0x40] sm:$0xff]
    %v44 = vld [vmem:[%s4 + $0x48] sm:$0xff]
    %v45 = vld [vmem:[%s4 + $0x50] sm:$0xff]
    %v46 = vld [vmem:[%s4 + $0x58] sm:$0xff]
    %v47 = vld [vmem:[%s4 + $0x60] sm:$0xff]
    %v48 = vld [vmem:[%s4 + $0x68] sm:$0xff]
    %v49 = vld [vmem:[%s4 + $0x70] sm:$0xff]
    %v50 = vld [vmem:[%s4 + $0x78] sm:$0xff]
    %v51 = vld [vmem:[%s4 + $0x80] sm:$0xff]
    %v52 = vld [vmem:[%s4 + $0x88] sm:$0xff]
    %v53 = vld [vmem:[%s4 + $0x90] sm:$0xff]
    %v54 = vld [vmem:[%s4 + $0x98] sm:$0xff]
    %v55 = vld [vmem:[%s4 + $0xa0] sm:$0xff]
    %v56 = vld [vmem:[%s4 + $0xa8] sm:$0xff]
    %v57 = vld [vmem:[%s4 + $0xb0] sm:$0xff]
    %v58 = vld [vmem:[%s4 + $0xb8] sm:$0xff]
    %v59 = vld [vmem:[%s4 + $0xc0] sm:$0xff]
    %v60 = vld [vmem:[%s4 + $0xc8] sm:$0xff]
    %v61 = vld [vmem:[%s4 + $0xd0] sm:$0xff]
    %v62 = vld [vmem:[%s4 + $0xd8] sm:$0xff]
    %v63 = vld [vmem:[%s4 + $0xe0] sm:$0xff]
    %v64 = vld [vmem:[%s4 + $0xe8] sm:$0xff]
    %v65 = vld [vmem:[%s4 + $0xf0] sm:$0xff]
    %v66 = vld [vmem:[%s4 + $0xf8] sm:$0xff]
    %v67 = vld [vmem:[%s4 + $0x100] sm:$0xff]
    %v68 = vld [vmem:[%s4 + $0x108] sm:$0xff]
    %v69 = vld [vmem:[%s4 + $0x110] sm:$0xff]
    %v70 = vld [vmem:[%s4 + $0x118] sm:$0xff]
    %v71 = vld [vmem:[%s4 + $0x120] sm:$0xff]
    %v72 = vld [vmem:[%s4 + $0x128] sm:$0xff]
    %v73 = vld [vmem:[%s4 + $0x130] sm:$0xff]
    %v74 = vld [vmem:[%s4 + $0x138] sm:$0xff]
    %v75 = vld [vmem:[%s4 + $0x140] sm:$0xff]
    %v76 = vld [vmem:[%s4 + $0x148] sm:$0xff]
    %v77 = vld [vmem:[%s4 + $0x150] sm:$0xff]
    %v78 = vld [vmem:[%s4 + $0x158] sm:$0xff]
    %v79 = vld [vmem:[%s4 + $0x160] sm:$0xff]
    %v80 = vld [vmem:[%s4 + $0x168] sm:$0xff]
    %v81 = vld [vmem:[%s4 + $0x170] sm:$0xff]
    %v82 = vld [vmem:[%s4 + $0x178] sm:$0xff]
    %v83 = vld [vmem:[%s4 + $0x180] sm:$0xff]
    %v84 = vld [vmem:[%s4 + $0x188] sm:$0xff]
    %v85 = vld [vmem:[%s4 + $0x190] sm:$0xff]
    %v86 = vld [vmem:[%s4 + $0x198] sm:$0xff]
    %v87 = vld [vmem:[%s4 + $0x1a0] sm:$0xff]
    %v88 = vld [vmem:[%s4 + $0x1a8] sm:$0xff]
    %v89 = vld [vmem:[%s4 + $0x1b0] sm:$0xff]
    %v90 = vld [vmem:[%s4 + $0x1b8] sm:$0xff]
    %v91 = vld [vmem:[%s4 + $0x1c0] sm:$0xff]
    %v92 = vld [vmem:[%s4 + $0x1c8] sm:$0xff]
    %v93 = vld [vmem:[%s4 + $0x1d0] sm:$0xff]
    %v94 = vld [vmem:[%s4 + $0x1d8] sm:$0xff]
    %v95 = vld [vmem:[%s4 + $0x1e0] sm:$0xff]
    %v96 = vld [vmem:[%s4 + $0x1e8] sm:$0xff]
    %v97 = vld [vmem:[%s4 + $0x1f0] sm:$0xff]
    %v98 = vld [vmem:[%s4 + $0x1f8] sm:$0xff]
    %v99 = vld [vmem:[%s4 + $0x200] sm:$0xff]
    %v100 = vld [vmem:[%s4 + $0x208] sm:$0xff]
    %v101 = vld [vmem:[%s4 + $0x210] sm:$0xff]
    %v102 = vld [vmem:[%s4 + $0x218] sm:$0xff]
    %v103 = vld [vmem:[%s4 + $0x220] sm:$0xff]
    %v104 = vld [vmem:[%s4 + $0x228] sm:$0xff]
    %v105 = vld [vmem:[%s4 + $0x230] sm:$0xff]
    %v106 = vld [vmem:[%s4 + $0x238] sm:$0xff]
    %v107 = vld [vmem:[%s4 + $0x240] sm:$0xff]
    %v108 = vld [vmem:[%s4 + $0x248] sm:$0xff]
    %v109 = vld [vmem:[%s4 + $0x250] sm:$0xff]
    %v110 = vld [vmem:[%s4 + $0x258] sm:$0xff]
    %v111 = vld [vmem:[%s4 + $0x260] sm:$0xff]
    %v112 = vld [vmem:[%s4 + $0x268] sm:$0xff]
    %v113 = vld [vmem:[%s4 + $0x270] sm:$0xff]
    %v114 = vld [vmem:[%s4 + $0x278] sm:$0xff]
    %v115 = vld [vmem:[%s4 + $0x280] sm:$0xff]
    %v116 = vld [vmem:[%s4 + $0x288] sm:$0xff]
    %v117 = vld [vmem:[%s4 + $0x290] sm:$0xff]
    %v118 = vld [vmem:[%s4 + $0x298] sm:$0xff]
    %v119 = vld [vmem:[%s4 + $0x2a0] sm:$0xff]
    %v120 = vld [vmem:[%s4 + $0x2a8] sm:$0xff]
    %v121 = vld [vmem:[%s4 + $0x2b0] sm:$0xff]
    %v122 = vld [vmem:[%s4 + $0x2b8] sm:$0xff]
    %v123 = vld [vmem:[%s4 + $0x2c0] sm:$0xff]
    %v124 = vld [vmem:[%s4 + $0x2c8] sm:$0xff]
    %v125 = vld [vmem:[%s4 + $0x2d0] sm:$0xff]
    %v126 = vld [vmem:[%s4 + $0x2d8] sm:$0xff]
    %v127 = vld [vmem:[%s4 + $0x2e0] sm:$0xff]
    %v128 = vld [vmem:[%s4 + $0x2e8] sm:$0xff]
    %v129 = vld [vmem:[%s4 + $0x2f0] sm:$0xff]
    %v130 = vld [vmem:[%s4 + $0x2f8] sm:$0xff]
    %131 = vmatpush.msra.mxu0 %v80
    %132 = vmatpush.msra.mxu0 %v77
    %133 = vmatpush.msra.mxu0 %v74
    %134 = vmatpush.msra.mxu0 %v71
    %135 = vmatpush.msra.mxu0 %v68
    %136 = vmatpush.msra.mxu0 %v65
    %137 = vmatpush.msra.mxu0 %v62
    %138 = vmatpush.msra.mxu0 %v59
    %139 = vmatpush.msra.mxu0 %v56
    %140 = vmatpush.msra.mxu0 %v53
    %141 = vmatpush.msra.mxu0 %v50
    %142 = vmatpush.msra.mxu0 %v47
    %143 = vmatpush.msra.mxu0 %v44
    %144 = vmatpush.msra.mxu0 %v41
    %145 = vmatpush.msra.mxu0 %v38
    %146 = vmatpush.msra.mxu0 %v35
    %147 = vmatmul.f32.gmra.mxu0 %v32
    %v148 = vpop.f32.mrf.mxu0
    %v149 = vadd.f32 0.0, %v148
    %150 = vdwg.mxu0
    %151 = vmatpush.msra.mxu0 %v81
    %152 = vmatpush.msra.mxu0 %v78
    %153 = vmatpush.msra.mxu0 %v75
    %154 = vmatpush.msra.mxu0 %v72
    %155 = vmatpush.msra.mxu0 %v69
    %156 = vmatpush.msra.mxu0 %v66
    %157 = vmatpush.msra.mxu0 %v63
    %158 = vmatpush.msra.mxu0 %v60
    %159 = vmatpush.msra.mxu0 %v57
    %160 = vmatpush.msra.mxu0 %v54
    %161 = vmatpush.msra.mxu0 %v51
    %162 = vmatpush.msra.mxu0 %v48
    %163 = vmatpush.msra.mxu0 %v45
    %164 = vmatpush.msra.mxu0 %v42
    %165 = vmatpush.msra.mxu0 %v39
    %166 = vmatpush.msra.mxu0 %v36
    %167 = vmatmul.f32.gmra.mxu0 %v32
    %v168 = vpop.f32.mrf.mxu0
    %v169 = vadd.f32 0.0, %v168
    %170 = vdwg.mxu0
    %171 = vmatpush.msra.mxu0 %v82
    %172 = vmatpush.msra.mxu0 %v79
    %173 = vmatpush.msra.mxu0 %v76
    %174 = vmatpush.msra.mxu0 %v73
    %175 = vmatpush.msra.mxu0 %v70
    %176 = vmatpush.msra.mxu0 %v67
    %177 = vmatpush.msra.mxu0 %v64
    %178 = vmatpush.msra.mxu0 %v61
    %179 = vmatpush.msra.mxu0 %v58
    %180 = vmatpush.msra.mxu0 %v55
    %181 = vmatpush.msra.mxu0 %v52
    %182 = vmatpush.msra.mxu0 %v49
    %183 = vmatpush.msra.mxu0 %v46
    %184 = vmatpush.msra.mxu0 %v43
    %185 = vmatpush.msra.mxu0 %v40
    %186 = vmatpush.msra.mxu0 %v37
    %187 = vmatmul.f32.gmra.mxu0 %v32
    %v188 = vpop.f32.mrf.mxu0
    %v189 = vadd.f32 0.0, %v188
    %190 = vdwg.mxu0
    %191 = vmatpush.msra.mxu0 %v128
    %192 = vmatpush.msra.mxu0 %v125
    %193 = vmatpush.msra.mxu0 %v122
    %194 = vmatpush.msra.mxu0 %v119
    %195 = vmatpush.msra.mxu0 %v116
    %196 = vmatpush.msra.mxu0 %v113
    %197 = vmatpush.msra.mxu0 %v110
    %198 = vmatpush.msra.mxu0 %v107
    %199 = vmatpush.msra.mxu0 %v104
    %200 = vmatpush.msra.mxu0 %v101
    %201 = vmatpush.msra.mxu0 %v98
    %202 = vmatpush.msra.mxu0 %v95
    %203 = vmatpush.msra.mxu0 %v92
    %204 = vmatpush.msra.mxu0 %v89
    %205 = vmatpush.msra.mxu0 %v86
    %206 = vmatpush.msra.mxu0 %v83
    %207 = vmatmul.f32.gmra.mxu0 %v33
    %v208 = vpop.f32.mrf.mxu0
    %v209 = vadd.f32 0.0, %v208
    %210 = vdwg.mxu0
    %211 = vmatpush.msra.mxu0 %v129
    %212 = vmatpush.msra.mxu0 %v126
    %213 = vmatpush.msra.mxu0 %v123
    %214 = vmatpush.msra.mxu0 %v120
    %215 = vmatpush.msra.mxu0 %v117
    %216 = vmatpush.msra.mxu0 %v114
    %217 = vmatpush.msra.mxu0 %v111
    %218 = vmatpush.msra.mxu0 %v108
    %219 = vmatpush.msra.mxu0 %v105
    %220 = vmatpush.msra.mxu0 %v102
    %221 = vmatpush.msra.mxu0 %v99
    %222 = vmatpush.msra.mxu0 %v96
    %223 = vmatpush.msra.mxu0 %v93
    %224 = vmatpush.msra.mxu0 %v90
    %225 = vmatpush.msra.mxu0 %v87
    %226 = vmatpush.msra.mxu0 %v84
    %227 = vmatmul.f32.gmra.mxu0 %v33
    %v228 = vpop.f32.mrf.mxu0
    %v229 = vadd.f32 0.0, %v228
    %230 = vdwg.mxu0
    %231 = vmatpush.msra.mxu0 %v130
    %232 = vmatpush.msra.mxu0 %v127
    %233 = vmatpush.msra.mxu0 %v124
    %234 = vmatpush.msra.mxu0 %v121
    %235 = vmatpush.msra.mxu0 %v118
    %236 = vmatpush.msra.mxu0 %v115
    %237 = vmatpush.msra.mxu0 %v112
    %238 = vmatpush.msra.mxu0 %v109
    %239 = vmatpush.msra.mxu0 %v106
    %240 = vmatpush.msra.mxu0 %v103
    %241 = vmatpush.msra.mxu0 %v100
    %242 = vmatpush.msra.mxu0 %v97
    %243 = vmatpush.msra.mxu0 %v94
    %244 = vmatpush.msra.mxu0 %v91
    %245 = vmatpush.msra.mxu0 %v88
    %246 = vmatpush.msra.mxu0 %v85
    %247 = vmatmul.f32.gmra.mxu0 %v33
    %v248 = vpop.f32.mrf.mxu0
    %v249 = vadd.f32 0.0, %v248
    %250 = vdwg.mxu0
    %v251 = vadd.f32 %v149, %v209
    %v252 = vperm.slane %v34, 0
    %v253 = vadd.f32 %v251, %v252
    %v254 = vxor.u32 %v253, 2147483648
    %v255 = vmul.f32 %v254, 1.442695
    %v256 = vpow.pop %v255
    %v257 = vadd.f32 %v256, 1.0
    %v258 = vrcp.pop %v257
    %v259 = vmul.f32 %v257, %v258
    %v260 = vsub.f32 1.0, %v259
    %v261 = vmul.f32 %v258, %v260
    %v262 = vadd.f32 %v258, %v261
    %vm263 = vweird.f32 %v257
    %vm264 = vweird.f32 %v258
    %vm265 = vmor %vm263, %vm264
    %v266 = vsel %vm265, %v258, %v262
    %v267 = vand.u32 2147483647, %v257
    %vm268 = vcmp.eq.f32.partialorder %v267, 8.507059e+37
    %v269 = vand.u32 %v257, 2147483648
    %v270 = vor.u32 1.1754944e-38, %v269
    %v271 = vsel %vm268, %v270, %v266
    %v272 = vmul.f32 1.0, %v271
    %v273 = vadd.f32 %v169, %v229
    %v274 = vperm.slane %v34, 1
    %v275 = vadd.f32 %v273, %v274
    %v276 = vxor.u32 %v275, 2147483648
    %v277 = vmul.f32 %v276, 1.442695
    %v278 = vpow.pop %v277
    %v279 = vadd.f32 %v278, 1.0
    %v280 = vrcp.pop %v279
    %v281 = vmul.f32 %v279, %v280
    %v282 = vsub.f32 1.0, %v281
    %v283 = vmul.f32 %v280, %v282
    %v284 = vadd.f32 %v280, %v283
    %vm285 = vweird.f32 %v279
    %vm286 = vweird.f32 %v280
    %vm287 = vmor %vm285, %vm286
    %v288 = vsel %vm287, %v280, %v284
    %v289 = vand.u32 2147483647, %v279
    %vm290 = vcmp.eq.f32.partialorder %v289, 8.507059e+37
    %v291 = vand.u32 %v279, 2147483648
    %v292 = vor.u32 1.1754944e-38, %v291
    %v293 = vsel %vm290, %v292, %v288
    %v294 = vmul.f32 1.0, %v293
    %v295 = vperm.slane %v34, 2
    %v296 = vadd.f32 %v189, %v295
    %v297 = vperm.slane %v34, 3
    %v298 = vadd.f32 %v249, %v297
    %v299 = vmul.f32 %v272, %v298
    %v300 = vadd.f32 %v296, %v299
    %v301 = vtanh.pop %v300
    %v302 = vsub.f32 1.0, %v294
    %v303 = vmul.f32 %v302, %v301
    %v304 = vmul.f32 %v294, %v33
    %v305 = vadd.f32 %v303, %v304
    %306 = vst [vmem:[%s9] sm:$0x3] %v305
    %v307 = vld [vmem:[%s0] sm:$0xff]
    %v308 = vld [vmem:[%s0 + $0x8] sm:$0xff]
    %v309 = vld [vmem:[%s1] sm:$0xff]
    %v310 = vld [vmem:[%s1 + $0x8] sm:$0xff]
    %v311 = vld [vmem:[%s5] sm:$0xff]
    %v312 = vld [vmem:[%s5 + $0x8] sm:$0xff]
    %v313 = vld [vmem:[%s5 + $0x10] sm:$0xff]
    %v314 = vld [vmem:[%s5 + $0x18] sm:$0xff]
    %v315 = vld [vmem:[%s5 + $0x20] sm:$0xff]
    %v316 = vld [vmem:[%s5 + $0x28] sm:$0xff]
    %v317 = vld [vmem:[%s5 + $0x30] sm:$0xff]
    %v318 = vld [vmem:[%s5 + $0x38] sm:$0xff]
    %v319 = vld [vmem:[%s5 + $0x40] sm:$0xff]
    %v320 = vld [vmem:[%s5 + $0x48] sm:$0xff]
    %v321 = vld [vmem:[%s5 + $0x50] sm:$0xff]
    %v322 = vld [vmem:[%s5 + $0x58] sm:$0xff]
    %v323 = vld [vmem:[%s5 + $0x60] sm:$0xff]
    %v324 = vld [vmem:[%s5 + $0x68] sm:$0xff]
    %v325 = vld [vmem:[%s5 + $0x70] sm:$0xff]
    %v326 = vld [vmem:[%s5 + $0x78] sm:$0xff]
    %v327 = vld [vmem:[%s5 + $0x80] sm:$0xff]
    %v328 = vld [vmem:[%s5 + $0x88] sm:$0xff]
    %v329 = vld [vmem:[%s5 + $0x90] sm:$0xff]
    %v330 = vld [vmem:[%s5 + $0x98] sm:$0xff]
    %v331 = vld [vmem:[%s5 + $0xa0] sm:$0xff]
    %v332 = vld [vmem:[%s5 + $0xa8] sm:$0xff]
    %v333 = vld [vmem:[%s5 + $0xb0] sm:$0xff]
    %v334 = vld [vmem:[%s5 + $0xb8] sm:$0xff]
    %v335 = vld [vmem:[%s5 + $0xc0] sm:$0xff]
    %v336 = vld [vmem:[%s5 + $0xc8] sm:$0xff]
    %v337 = vld [vmem:[%s5 + $0xd0] sm:$0xff]
    %v338 = vld [vmem:[%s5 + $0xd8] sm:$0xff]
    %v339 = vld [vmem:[%s5 + $0xe0] sm:$0xff]
    %v340 = vld [vmem:[%s5 + $0xe8] sm:$0xff]
    %v341 = vld [vmem:[%s5 + $0xf0] sm:$0xff]
    %v342 = vld [vmem:[%s5 + $0xf8] sm:$0xff]
    %v343 = vld [vmem:[%s5 + $0x100] sm:$0xff]
    %v344 = vld [vmem:[%s5 + $0x108] sm:$0xff]
    %v345 = vld [vmem:[%s5 + $0x110] sm:$0xff]
    %v346 = vld [vmem:[%s5 + $0x118] sm:$0xff]
    %v347 = vld [vmem:[%s5 + $0x120] sm:$0xff]
    %v348 = vld [vmem:[%s5 + $0x128] sm:$0xff]
    %v349 = vld [vmem:[%s5 + $0x130] sm:$0xff]
    %v350 = vld [vmem:[%s5 + $0x138] sm:$0xff]
    %v351 = vld [vmem:[%s5 + $0x140] sm:$0xff]
    %v352 = vld [vmem:[%s5 + $0x148] sm:$0xff]
    %v353 = vld [vmem:[%s5 + $0x150] sm:$0xff]
    %v354 = vld [vmem:[%s5 + $0x158] sm:$0xff]
    %v355 = vld [vmem:[%s5 + $0x160] sm:$0xff]
    %v356 = vld [vmem:[%s5 + $0x168] sm:$0xff]
    %v357 = vld [vmem:[%s5 + $0x170] sm:$0xff]
    %v358 = vld [vmem:[%s5 + $0x178] sm:$0xff]
    %359 = vmatpush.msra.mxu0 %v342
    %360 = vmatpush.msra.mxu0 %v341
    %361 = vmatpush.msra.mxu0 %v340
    %362 = vmatpush.msra.mxu0 %v339
    %363 = vmatpush.msra.mxu0 %v338
    %364 = vmatpush.msra.mxu0 %v337
    %365 = vmatpush.msra.mxu0 %v336
    %366 = vmatpush.msra.mxu0 %v335
    %367 = vmatpush.msra.mxu0 %v334
    %368 = vmatpush.msra.mxu0 %v333
    %369 = vmatpush.msra.mxu0 %v332
    %370 = vmatpush.msra.mxu0 %v331
    %371 = vmatpush.msra.mxu0 %v330
    %372 = vmatpush.msra.mxu0 %v329
    %373 = vmatpush.msra.mxu0 %v328
    %374 = vmatpush.msra.mxu0 %v327
    %375 = vmatmul.f32.gmra.mxu0 %v309
    %v376 = vpop.f32.mrf.mxu0
    %v377 = vadd.f32 0.0, %v376
    %378 = vmatmul.f32.gmra.mxu0 %v310
    %v379 = vpop.f32.mrf.mxu0
    %v380 = vadd.f32 0.0, %v379
    %381 = vdwg.mxu0
    %382 = vmatpush.msra.mxu0 %v326
    %383 = vmatpush.msra.mxu0 %v325
    %384 = vmatpush.msra.mxu0 %v324
    %385 = vmatpush.msra.mxu0 %v323
    %386 = vmatpush.msra.mxu0 %v322
    %387 = vmatpush.msra.mxu0 %v321
    %388 = vmatpush.msra.mxu0 %v320
    %389 = vmatpush.msra.mxu0 %v319
    %390 = vmatpush.msra.mxu0 %v318
    %391 = vmatpush.msra.mxu0 %v317
    %392 = vmatpush.msra.mxu0 %v316
    %393 = vmatpush.msra.mxu0 %v315
    %394 = vmatpush.msra.mxu0 %v314
    %395 = vmatpush.msra.mxu0 %v313
    %396 = vmatpush.msra.mxu0 %v312
    %397 = vmatpush.msra.mxu0 %v311
    %398 = vmatmul.f32.gmra.mxu0 %v307
    %v399 = vpop.f32.mrf.mxu0
    %v400 = vadd.f32 %v377, %v399
    %401 = vmatmul.f32.gmra.mxu0 %v308
    %v402 = vpop.f32.mrf.mxu0
    %v403 = vadd.f32 %v380, %v402
    %404 = vdwg.mxu0
    %405 = vmatpush.msra.mxu0 %v358
    %406 = vmatpush.msra.mxu0 %v357
    %407 = vmatpush.msra.mxu0 %v356
    %408 = vmatpush.msra.mxu0 %v355
    %409 = vmatpush.msra.mxu0 %v354
    %410 = vmatpush.msra.mxu0 %v353
    %411 = vmatpush.msra.mxu0 %v352
    %412 = vmatpush.msra.mxu0 %v351
    %413 = vmatpush.msra.mxu0 %v350
    %414 = vmatpush.msra.mxu0 %v349
    %415 = vmatpush.msra.mxu0 %v348
    %416 = vmatpush.msra.mxu0 %v347
    %417 = vmatpush.msra.mxu0 %v346
    %418 = vmatpush.msra.mxu0 %v345
    %419 = vmatpush.msra.mxu0 %v344
    %420 = vmatpush.msra.mxu0 %v343
    %421 = vmatmul.f32.gmra.mxu0 %v305
    %v422 = vpop.f32.mrf.mxu0
    %v423 = vadd.f32 0.0, %v422
    %424 = vdwg.mxu0
    %v426 = vrot.slane %v423, 1
    %v427 = vperm.slane %v423, 0
    %v428 = vperm.slane %v426, 0
    %v431 = vadd.f32 %v400, %v427
    %v432 = vadd.f32 %v403, %v428
    %v433 = vtanh.pop %v431
    %v434 = vtanh.pop %v432
    %v435 = vperm.slane %v34, 4
    %v436 = vmul.f32 %v433, %v435
    %v437 = vmul.f32 %v434, %v435
    %438 = vadd.xlane.f32.xlu0 %v436
    %v439 = vpop.xlane.xlu0 %438
    %440 = vadd.xlane.f32.xlu0 %v437
    %v441 = vpop.xlane.xlu0 %440
    %v442 = vrot.slane %v439, 4
    %v443 = vmax.f32 %v439, %v442
    %v444 = vrot.slane %v443, 2
    %v445 = vmax.f32 %v443, %v444
    %v446 = vrot.slane %v445, 1
    %v447 = vmax.f32 %v445, %v446
    %v448 = vrot.slane %v441, 4
    %v449 = vmax.f32 %v441, %v448
    %v450 = vrot.slane %v449, 2
    %v451 = vmax.f32 %v449, %v450
    %v452 = vrot.slane %v451, 1
    %v453 = vmax.f32 %v451, %v452
    %v454 = vsub.f32 %v439, %v447
    %v455 = vsub.f32 %v441, %v453
    %v456 = vmul.f32 %v454, 1.442695
    %v457 = vpow.pop %v456
    %v458 = vmul.f32 %v455, 1.442695
    %v459 = vpow.pop %v458
    %v460 = vrot.slane %v457, 4
    %v461 = vadd.f32 %v457, %v460
    %v462 = vrot.slane %v461, 2
    %v463 = vadd.f32 %v461, %v462
    %v464 = vrot.slane %v463, 1
    %v465 = vadd.f32 %v463, %v464
    %v466 = vrot.slane %v459, 4
    %v467 = vadd.f32 %v459, %v466
    %v468 = vrot.slane %v467, 2
    %v469 = vadd.f32 %v467, %v468
    %v470 = vrot.slane %v469, 1
    %v471 = vadd.f32 %v469, %v470
    %v472 = vrcp.pop %v465
    %v473 = vmul.f32 %v465, %v472
    %v474 = vsub.f32 1.0, %v473
    %v475 = vmul.f32 %v472, %v474
    %v476 = vadd.f32 %v472, %v475
    %vm477 = vweird.f32 %v465
    %vm478 = vweird.f32 %v472
    %vm479 = vmor %vm477, %vm478
    %v480 = vsel %vm479, %v472, %v476
    %v481 = vand.u32 2147483647, %v465
    %vm482 = vcmp.eq.f32.partialorder %v481, 8.507059e+37
    %v483 = vand.u32 %v465, 2147483648
    %v484 = vor.u32 1.1754944e-38, %v483
    %v485 = vsel %vm482, %v484, %v480
    %v486 = vrcp.pop %v471
    %v487 = vmul.f32 %v471, %v486
    %v488 = vsub.f32 1.0, %v487
    %v489 = vmul.f32 %v486, %v488
    %v490 = vadd.f32 %v486, %v489
    %vm491 = vweird.f32 %v471
    %vm492 = vweird.f32 %v486
    %vm493 = vmor %vm491, %vm492
    %v494 = vsel %vm493, %v486, %v490
    %v495 = vand.u32 2147483647, %v471
    %vm496 = vcmp.eq.f32.partialorder %v495, 8.507059e+37
    %v497 = vand.u32 %v471, 2147483648
    %v498 = vor.u32 1.1754944e-38, %v497
    %v499 = vsel %vm496, %v498, %v494
    %v500 = vmul.f32 %v457, %v485
    %v501 = vmul.f32 %v459, %v499
    %v502 = vmul.f32 %v500, %v307
    %v503 = vmul.f32 %v501, %v308
    %v504 = vrot.slane %v502, 4
    %v505 = vadd.f32 %v502, %v504
    %v506 = vrot.slane %v505, 2
    %v507 = vadd.f32 %v505, %v506
    %v508 = vrot.slane %v507, 1
    %v509 = vadd.f32 %v507, %v508
    %v510 = vrot.slane %v503, 4
    %v511 = vadd.f32 %v503, %v510
    %v512 = vrot.slane %v511, 2
    %v513 = vadd.f32 %v511, %v512
    %v514 = vrot.slane %v513, 1
    %v515 = vadd.f32 %v513, %v514
    %v516 = vld [vmem:[%s6] sm:$0xff]
    %v517 = vld [vmem:[%s6 + $0x8] sm:$0xff]
    %v518 = vld [vmem:[%s6 + $0x10] sm:$0xff]
    %v519 = vld [vmem:[%s6 + $0x18] sm:$0xff]
    %v520 = vld [vmem:[%s6 + $0x20] sm:$0xff]
    %v521 = vld [vmem:[%s6 + $0x28] sm:$0xff]
    %v522 = vld [vmem:[%s6 + $0x30] sm:$0xff]
    %v523 = vld [vmem:[%s6 + $0x38] sm:$0xff]
    %v524 = vld [vmem:[%s6 + $0x40] sm:$0xff]
    %v525 = vld [vmem:[%s6 + $0x48] sm:$0xff]
    %v526 = vld [vmem:[%s6 + $0x50] sm:$0xff]
    %v527 = vld [vmem:[%s6 + $0x58] sm:$0xff]
    %v528 = vld [vmem:[%s6 + $0x60] sm:$0xff]
    %v529 = vld [vmem:[%s6 + $0x68] sm:$0xff]
    %v530 = vld [vmem:[%s6 + $0x70] sm:$0xff]
    %v531 = vld [vmem:[%s6 + $0x78] sm:$0xff]
    %v532 = vld [vmem:[%s6 + $0x80] sm:$0xff]
    %v533 = vld [vmem:[%s6 + $0x88] sm:$0xff]
    %v534 = vld [vmem:[%s6 + $0x90] sm:$0xff]
    %v535 = vld [vmem:[%s6 + $0x98] sm:$0xff]
    %v536 = vld [vmem:[%s6 + $0xa0] sm:$0xff]
    %v537 = vld [vmem:[%s6 + $0xa8] sm:$0xff]
    %v538 = vld [vmem:[%s6 + $0xb0] sm:$0xff]
    %v539 = vld [vmem:[%s6 + $0xb8] sm:$0xff]
    %v540 = vld [vmem:[%s6 + $0xc0] sm:$0xff]
    %v541 = vld [vmem:[%s6 + $0xc8] sm:$0xff]
    %v542 = vld [vmem:[%s6 + $0xd0] sm:$0xff]
    %v543 = vld [vmem:[%s6 + $0xd8] sm:$0xff]
    %v544 = vld [vmem:[%s6 + $0xe0] sm:$0xff]
    %v545 = vld [vmem:[%s6 + $0xe8] sm:$0xff]
    %v546 = vld [vmem:[%s6 + $0xf0] sm:$0xff]
    %v547 = vld [vmem:[%s6 + $0xf8] sm:$0xff]
    %548 = vmatpush.msra.mxu0 %v531
    %549 = vmatpush.msra.mxu0 %v530
    %550 = vmatpush.msra.mxu0 %v529
    %551 = vmatpush.msra.mxu0 %v528
    %552 = vmatpush.msra.mxu0 %v527
    %553 = vmatpush.msra.mxu0 %v526
    %554 = vmatpush.msra.mxu0 %v525
    %555 = vmatpush.msra.mxu0 %v524
    %556 = vmatpush.msra.mxu0 %v523
    %557 = vmatpush.msra.mxu0 %v522
    %558 = vmatpush.msra.mxu0 %v521
    %559 = vmatpush.msra.mxu0 %v520
    %560 = vmatpush.msra.mxu0 %v519
    %561 = vmatpush.msra.mxu0 %v518
    %562 = vmatpush.msra.mxu0 %v517
    %563 = vmatpush.msra.mxu0 %v516
    %564 = vmatmul.f32.gmra.mxu0 %v307
    %v565 = vpop.f32.mrf.mxu0
    %v566 = vadd.f32 0.0, %v565
    %567 = vmatmul.f32.gmra.mxu0 %v308
    %v568 = vpop.f32.mrf.mxu0
    %v569 = vadd.f32 0.0, %v568
    %570 = vdwg.mxu0
    %vm573 = vcmask 1041409
    %v574 = vsel %vm573, %v515, %v509
    %576 = vmatpush.msra.mxu0 %v547
    %577 = vmatpush.msra.mxu0 %v546
    %578 = vmatpush.msra.mxu0 %v545
    %579 = vmatpush.msra.mxu0 %v544
    %580 = vmatpush.msra.mxu0 %v543
    %581 = vmatpush.msra.mxu0 %v542
    %582 = vmatpush.msra.mxu0 %v541
    %583 = vmatpush.msra.mxu0 %v540
    %584 = vmatpush.msra.mxu0 %v539
    %585 = vmatpush.msra.mxu0 %v538
    %586 = vmatpush.msra.mxu0 %v537
    %587 = vmatpush.msra.mxu0 %v536
    %588 = vmatpush.msra.mxu0 %v535
    %589 = vmatpush.msra.mxu0 %v534
    %590 = vmatpush.msra.mxu0 %v533
    %591 = vmatpush.msra.mxu0 %v532
    %592 = vmatmul.f32.gmra.mxu0 %v574
    %v593 = vpop.f32.mrf.mxu0
    %v594 = vadd.f32 0.0, %v593
    %595 = vdwg.mxu0
    %v597 = vrot.slane %v594, 1
    %v598 = vperm.slane %v594, 0
    %v599 = vperm.slane %v597, 0
    %v602 = vadd.f32 %v566, %v598
    %v603 = vadd.f32 %v569, %v599
    %v604 = vtanh.pop %v602
    %v605 = vtanh.pop %v603
    %v606 = vperm.slane %v34, 5
    %v607 = vmul.f32 %v604, %v606
    %v608 = vmul.f32 %v605, %v606
    %609 = vadd.xlane.f32.xlu0 %v607
    %v610 = vpop.xlane.xlu0 %609
    %611 = vadd.xlane.f32.xlu0 %v608
    %v612 = vpop.xlane.xlu0 %611
    %v615 = vlaneseq
    %v616 = vand.u32 %v615, 127
    %v617 = vperm.slane %v610, %v616
    %v618 = vperm.slane %v612, %v616
    %v619 = vsel %vm573, %v618, %v617
    %vm621 = vcmask 58368
    %622 = vst.msk [vmem:[#allocation2] sm:$0x3] %vm621, %v619
    // Predicated region
    $region34: #{pointer_forward.1} parent=1 // pred_check
      _
    $region35: #{pointer_forward.1} parent=1 // pred_check_branch
      %624 = sbr.rel (0) target = $region37
    $region36: #{pointer_forward.1} parent=1 // pred_region
      %626 = vsyncadd [#allocation3], 0
      %s628 = sshll.u32 [#allocation2], 4
      %s629 = int_to_ptr.vmem [resolvable:$true] %s628
      %s630 = sshll.u32 %s8, 4
      %s631 = int_to_ptr.hbm [resolvable:$true] %s630
      %633 = dma.vmem_to_hbm [thread:$0]  %s629, 32, %s631, [#allocation3]
    $region37: #{pointer_forward.1} parent=1 // pred_fallthru
      _
    // Predicated region
    $region38: #{pointer_forward.1} parent=1 // pred_check
      _
    $region39: #{pointer_forward.1} parent=1 // pred_check_branch
      %635 = sbr.rel (0) target = $region41
    $region40: #{pointer_forward.1} parent=1 // pred_region
      _
    $region41: #{pointer_forward.1} parent=1 // pred_fallthru
      _
    // Predicated region
    $region42: #{pointer_forward.1} parent=1 // pred_check
      _
    $region43: #{pointer_forward.1} parent=1 // pred_check_branch
      %637 = sbr.rel (0) target = $region45
    $region44: #{pointer_forward.1} parent=1 // pred_region
      %639 = dma.done [#allocation3], 32
    $region45: #{pointer_forward.1} parent=1 // pred_fallthru
      _
    // Predicated region
    $region46: #{pointer_forward.1} parent=1 // pred_check
      _
    $region47: #{pointer_forward.1} parent=1 // pred_check_branch
      %641 = sbr.rel (0) target = $region49
    $region48: #{pointer_forward.1} parent=1 // pred_region
      _
    $region49: #{pointer_forward.1} parent=1 // pred_fallthru
      _
    %642 = vsyncpa [#allocation3], 1

</llo_original>
